<compile_context>
chip_gen: v7x
topology: tpu7x:2x2x1
jax: 0.10.0
libtpu: 0.0.40
codegen_flags: <defaults>
</compile_context>

<pallas_src>
import functools

import jax
import jax.numpy as jnp
from jax import lax
from jax.experimental import pallas as pl
from jax.experimental.pallas import tpu as pltpu

_BLOCK_BYTES = 2 * 1024 * 1024        # per-input, per-buffer VMEM block cap
_VMEM_LIMIT_BYTES = 32 * 1024 * 1024  # raise v5e's 16 MiB default (== v6e/v7x default)


def _round_up(x, m):
    return ((x + m - 1) // m) * m


# ---------------------------------------------------------------------------
# In-kernel helpers
# ---------------------------------------------------------------------------
def _bce_elem(o, t):
    """Elementwise BCE with PyTorch's -100 log clamp (f32 accumulation)."""
    o = o.astype(jnp.float32)
    t = t.astype(jnp.float32)
    log_o = jnp.maximum(jnp.log(o), -100.0)
    log_1mo = jnp.maximum(jnp.log(1.0 - o), -100.0)
    return -(t * log_o + (1.0 - t) * log_1mo)


def _mask_tail_rows(contrib, valid_rows):
    """Zero contributions from rows >= valid_rows (ragged last tile / OOB pad).

    jnp.where select: garbage/NaN values in the padded region are never
    propagated (unlike a multiplicative mask).
    """
    m = contrib.shape[0]
    row = pl.program_id(0) * m + lax.broadcasted_iota(jnp.int32, (m, 1), 0)
    return jnp.where(row < valid_rows, contrib, 0.0)


def _accumulate(acc_ref, contrib):
    """Fold a (tile_m, C) contribution into a small (8, C) / (1, C) accumulator."""
    m, c = contrib.shape
    if m % 8 != 0:
        # single full-dim block with <8 (or ragged) rows: tiny cross-sublane sum
        acc_ref[...] += jnp.sum(contrib, axis=0, keepdims=True)
    elif m == 8:
        acc_ref[...] += contrib
    else:
        # layout-preserving reshape; axis-0 sum lowers to plain vreg adds
        acc_ref[...] += contrib.reshape(m // 8, 8, c).sum(axis=0)


# ---------------------------------------------------------------------------
# Kernels
# ---------------------------------------------------------------------------
def _bce_sum_kernel(o_ref, t_ref, out_ref, acc_ref, *, scale, valid_rows, need_mask):
    @pl.when(pl.program_id(0) == 0)
    def _init():
        acc_ref[...] = jnp.zeros_like(acc_ref)

    contrib = _bce_elem(o_ref[...], t_ref[...])
    if need_mask:
        contrib = _mask_tail_rows(contrib, valid_rows)
    _accumulate(acc_ref, contrib)

    @pl.when(pl.program_id(0) == pl.num_programs(0) - 1)
    def _finalize():
        out_ref[...] = jnp.full(out_ref.shape,
                                jnp.sum(acc_ref[...]) * scale, jnp.float32)


def _bce_weighted_sum_kernel(o_ref, t_ref, w_ref, out_ref, acc_ref, *,
                             scale, valid_rows, need_mask):
    """w_ref is (tile, 1) (row weight, broadcast over lanes) or the same block
    shape as o/t (full elementwise weight)."""
    @pl.when(pl.program_id(0) == 0)
    def _init():
        acc_ref[...] = jnp.zeros_like(acc_ref)

    w = w_ref[...].astype(jnp.float32)
    contrib = w * _bce_elem(o_ref[...], t_ref[...])
    if need_mask:
        contrib = _mask_tail_rows(contrib, valid_rows)
    _accumulate(acc_ref, contrib)

    @pl.when(pl.program_id(0) == pl.num_programs(0) - 1)
    def _finalize():
        out_ref[...] = jnp.full(out_ref.shape,
                                jnp.sum(acc_ref[...]) * scale, jnp.float32)


# ---------------------------------------------------------------------------
# pallas_call builder (shared by all paths); inputs are 2-D, no copies made
# ---------------------------------------------------------------------------
def _sum_call(o, t, w, scale):
    rows, cols = o.shape
    dtypes = [o.dtype, t.dtype] + ([w.dtype] if w is not None else [])
    sub = max(8, 32 // min(d.itemsize for d in dtypes))        # sublane multiple
    vmem_row_bytes = _round_up(cols, 128) * max(o.dtype.itemsize, t.dtype.itemsize)
    cap = max(sub, (_BLOCK_BYTES // vmem_row_bytes) // sub * sub)

    if rows <= cap:
        tile_m = rows            # single block == full dim (always a legal block)
    else:
        tile_m = cap             # multiple of 8/16/32; last block is masked
    grid = (pl.cdiv(rows, tile_m),)
    need_mask = (rows % tile_m) != 0
    acc_rows = 8 if tile_m % 8 == 0 else 1

    data_spec = pl.BlockSpec((tile_m, cols), lambda i: (i, 0))
    in_specs = [data_spec, data_spec]
    args = [o, t]
    if w is None:
        kernel = functools.partial(_bce_sum_kernel, scale=scale,
                                   valid_rows=rows, need_mask=need_mask)
    else:
        in_specs.append(pl.BlockSpec((tile_m, w.shape[1]), lambda i: (i, 0)))
        args.append(w)
        kernel = functools.partial(_bce_weighted_sum_kernel, scale=scale,
                                   valid_rows=rows, need_mask=need_mask)

    out = pl.pallas_call(
        kernel,
        out_shape=jax.ShapeDtypeStruct((8, 128), jnp.float32),
        grid_spec=pltpu.PrefetchScalarGridSpec(
            num_scalar_prefetch=0,
            grid=grid,
            in_specs=in_specs,
            # single result tile, resident across the reduction axis,
            # written only at the last grid step
            out_specs=pl.BlockSpec((8, 128), lambda i: (0, 0)),
            scratch_shapes=[pltpu.VMEM((acc_rows, cols), jnp.float32)],
        ),
        compiler_params=pltpu.CompilerParams(
            dimension_semantics=("arbitrary",),
            vmem_limit_bytes=_VMEM_LIMIT_BYTES,
        ),
    )(*args)
    return out[0, 0]


def _flat_or_rows(output, target, weight_full, scale):
    """Lane-dense flat slab when possible (zero-copy reshape), else natural [N,K]."""
    N, K = output.shape
    total = N * K
    lanes = 0
    for cand in (512, 256, 128):
        if total % cand == 0:
            lanes = cand
            break
    if lanes:
        rows = total // lanes
        o = output.reshape(rows, lanes)          # contiguous -> free reshape
        t = target.reshape(rows, lanes)
        w = None if weight_full is None else weight_full.reshape(rows, lanes)
        return _sum_call(o, t, w, scale)
    # ragged total: keep the natural [N, K] layout (zero copies; lanes are only
    # padded inside VMEM).  Typical mmpose shapes here are tiny anyway.
    return _sum_call(output, target, weight_full, scale)


# ---------------------------------------------------------------------------
# Public wrapper (jitted so the tiny reshapes / scalar extraction stay fused)
# ---------------------------------------------------------------------------
@functools.partial(jax.jit, static_argnames=("use_target_weight", "loss_weight"))
def bce_loss(output, target, target_weight=None,
             use_target_weight=False, loss_weight=1.0):
    """JAX/Pallas equivalent of mmpose BCELoss.forward."""
    N, K = output.shape
    # fold mean-normalization and loss_weight into the kernel's final write
    scale = float(loss_weight) / float(N * K)

    if not use_target_weight:
        return _flat_or_rows(output, target, None, scale)

    assert target_weight is not None
    if target_weight.ndim == 1 or target_weight.shape[-1] == 1:
        # [N] / [N,1] joint weight: keep as a column, broadcast over K in-kernel
        return _sum_call(output, target, target_weight.reshape(N, 1), scale)
    # user supplied a full [N, K] weight
    return _flat_or_rows(output, target, target_weight, scale)


if __name__ == "__main__":
    key = jax.random.PRNGKey(0)
    k1, k2, k3, k4, k5, k6 = jax.random.split(key, 6)

    def ref_bce(o, t, w, lw):
        l = -(t * jnp.maximum(jnp.log(o), -100.0)
              + (1.0 - t) * jnp.maximum(jnp.log(1.0 - o), -100.0))
        return (l * w).mean() * lw

    # --- small shapes consistent with the module (N=batch, K=num_labels) ---
    N, K = 2, 4
    output = jax.nn.sigmoid(jax.random.normal(k1, (N, K), jnp.float32))
    target = jax.random.uniform(k2, (N, K), jnp.float32)
    target_weight = jax.random.uniform(k3, (N,), jnp.float32)

    loss_plain = bce_loss(output, target, use_target_weight=False,
                          loss_weight=1.0)
    loss_roww = bce_loss(output, target, target_weight,
                         use_target_weight=True, loss_weight=0.5)
    full_w = jnp.broadcast_to(target_weight[:, None], (N, K))
    loss_fullw = bce_loss(output, target, full_w,
                          use_target_weight=True, loss_weight=0.5)
    jax.block_until_ready((loss_plain, loss_roww, loss_fullw))

    assert jnp.allclose(loss_plain,
                        ref_bce(output, target, jnp.ones((N, K), jnp.float32), 1.0),
                        rtol=1e-5, atol=1e-6)
    assert jnp.allclose(loss_roww,
                        ref_bce(output, target, target_weight[:, None], 0.5),
                        rtol=1e-5, atol=1e-6)
    assert jnp.allclose(loss_fullw,
                        ref_bce(output, target, target_weight[:, None], 0.5),
                        rtol=1e-5, atol=1e-6)

    # --- a larger case exercising the multi-step tiled + masked-tail path ---
    N2, K2 = 1100, 512
    out2 = jax.nn.sigmoid(jax.random.normal(k4, (N2, K2), jnp.float32))
    tgt2 = jax.random.uniform(k5, (N2, K2), jnp.float32)
    w2 = jax.random.uniform(k6, (N2,), jnp.float32)

    l2_plain = bce_loss(out2, tgt2, use_target_weight=False, loss_weight=1.0)
    l2_roww = bce_loss(out2, tgt2, w2, use_target_weight=True, loss_weight=1.0)
    jax.block_until_ready((l2_plain, l2_roww))

    assert jnp.allclose(l2_plain,
                        ref_bce(out2, tgt2, jnp.ones((N2, K2), jnp.float32), 1.0),
                        rtol=1e-4, atol=1e-6)
    assert jnp.allclose(l2_roww,
                        ref_bce(out2, tgt2, w2[:, None], 1.0),
                        rtol=1e-4, atol=1e-6)

    print("KERNEL_OK")
</pallas_src>

<mosaic_0001>
module attributes {stable_mosaic.version = 11 : i64} {
  func.func @_bce_sum_kernel(%arg0: i32, %arg1: memref<2x4xf32, #tpu.memory_space<vmem>>, %arg2: memref<2x4xf32, #tpu.memory_space<vmem>>, %arg3: memref<8x128xf32, #tpu.memory_space<vmem>>, %arg4: memref<1x4xf32, #tpu.memory_space<vmem>>) attributes {dimension_semantics = [#tpu.dimension_semantics<arbitrary>], iteration_bounds = array<i64: 1>, scalar_prefetch = 0 : i64, scratch_operands = 1 : i64, tpu.core_type = #tpu.core_type<tc>, window_params = [{transform_indices = @transform_0, window_bounds = array<i64: 2, 4>}, {transform_indices = @transform_1, window_bounds = array<i64: 2, 4>}, {pipeline_mode = #tpu.pipeline_mode<synchronous>, transform_indices = @transform_2, window_bounds = array<i64: 8, 128>}]} {
    %c0_i32 = arith.constant 0 : i32
    %0 = arith.cmpi eq, %arg0, %c0_i32 : i32
    %1 = arith.extui %0 : i1 to i32
    %c0_i32_0 = arith.constant 0 : i32
    %2 = arith.cmpi ne, %1, %c0_i32_0 : i32
    scf.if %2 {
      %cst_15 = arith.constant 0.000000e+00 : f32
      %28 = vector.broadcast %cst_15 : f32 to vector<1x4xf32>
      %c0_16 = arith.constant 0 : index
      %c0_17 = arith.constant 0 : index
      %29 = vector.load %arg4[%c0_16, %c0_17] : memref<1x4xf32, #tpu.memory_space<vmem>>, vector<1x4xf32>
      tpu.vector_store %arg4[%c0_16, %c0_17], %28 {strides = array<i32>} : memref<1x4xf32, #tpu.memory_space<vmem>>, vector<1x4xf32>,
    } else {
    }
    %c0 = arith.constant 0 : index
    %c0_1 = arith.constant 0 : index
    %3 = vector.load %arg1[%c0, %c0_1] : memref<2x4xf32, #tpu.memory_space<vmem>>, vector<2x4xf32>
    %c0_2 = arith.constant 0 : index
    %c0_3 = arith.constant 0 : index
    %4 = vector.load %arg2[%c0_2, %c0_3] : memref<2x4xf32, #tpu.memory_space<vmem>>, vector<2x4xf32>
    %5 = math.log %3 : vector<2x4xf32>
    %cst = arith.constant -1.000000e+02 : f32
    %6 = vector.broadcast %cst : f32 to vector<2x4xf32>
    %7 = arith.maximumf %5, %6 : vector<2x4xf32>
    %cst_4 = arith.constant 1.000000e+00 : f32
    %8 = vector.broadcast %cst_4 : f32 to vector<2x4xf32>
    %9 = arith.subf %8, %3 : vector<2x4xf32>
    %10 = math.log %9 : vector<2x4xf32>
    %cst_5 = arith.constant -1.000000e+02 : f32
    %11 = vector.broadcast %cst_5 : f32 to vector<2x4xf32>
    %12 = arith.maximumf %10, %11 : vector<2x4xf32>
    %13 = arith.mulf %4, %7 : vector<2x4xf32>
    %cst_6 = arith.constant 1.000000e+00 : f32
    %14 = vector.broadcast %cst_6 : f32 to vector<2x4xf32>
    %15 = arith.subf %14, %4 : vector<2x4xf32>
    %16 = arith.mulf %15, %12 : vector<2x4xf32>
    %17 = arith.addf %13, %16 : vector<2x4xf32>
    %cst_7 = arith.constant 0.000000e+00 : f32
    %18 = vector.broadcast %cst_7 : f32 to vector<2x4xf32>
    %19 = arith.subf %18, %17 : vector<2x4xf32>
    %c0_8 = arith.constant 0 : index
    %c0_9 = arith.constant 0 : index
    %20 = vector.load %arg4[%c0_8, %c0_9] : memref<1x4xf32, #tpu.memory_space<vmem>>, vector<1x4xf32>
    %cst_10 = arith.constant dense<0.000000e+00> : vector<4xf32>
    %21 = vector.multi_reduction <add>, %19, %cst_10 [0] : vector<2x4xf32> to vector<4xf32>
    %22 = vector.shape_cast %21 : vector<4xf32> to vector<1x4xf32>
    %23 = arith.addf %20, %22 : vector<1x4xf32>
    %c0_11 = arith.constant 0 : index
    %c0_12 = arith.constant 0 : index
    %24 = vector.load %arg4[%c0_11, %c0_12] : memref<1x4xf32, #tpu.memory_space<vmem>>, vector<1x4xf32>
    tpu.vector_store %arg4[%c0_11, %c0_12], %23 {strides = array<i32>} : memref<1x4xf32, #tpu.memory_space<vmem>>, vector<1x4xf32>,
    %c0_i32_13 = arith.constant 0 : i32
    %25 = arith.cmpi eq, %arg0, %c0_i32_13 : i32
    %26 = arith.extui %25 : i1 to i32
    %c0_i32_14 = arith.constant 0 : i32
    %27 = arith.cmpi ne, %26, %c0_i32_14 : i32
    scf.if %27 {
      %c0_15 = arith.constant 0 : index
      %c0_16 = arith.constant 0 : index
      %28 = vector.load %arg4[%c0_15, %c0_16] : memref<1x4xf32, #tpu.memory_space<vmem>>, vector<1x4xf32>
      %29 = vector.shape_cast %28 : vector<1x4xf32> to vector<1x1x4xf32>
      %cst_17 = arith.constant dense<0.000000e+00> : vector<1xf32>
      %30 = vector.multi_reduction <add>, %29, %cst_17 [1, 2] : vector<1x1x4xf32> to vector<1xf32>
      %31 = vector.shape_cast %30 : vector<1xf32> to vector<1x1x1xf32>
      %32 = vector.extract %31[0, 0, 0] : f32 from vector<1x1x1xf32>
      %cst_18 = arith.constant 1.250000e-01 : f32
      %33 = arith.mulf %32, %cst_18 : f32
      %34 = vector.broadcast %33 : f32 to vector<8x128xf32>
      %c0_19 = arith.constant 0 : index
      %c0_20 = arith.constant 0 : index
      %35 = vector.load %arg3[%c0_19, %c0_20] : memref<8x128xf32, #tpu.memory_space<vmem>>, vector<8x128xf32>
      tpu.vector_store %arg3[%c0_19, %c0_20], %34 {strides = array<i32>} : memref<8x128xf32, #tpu.memory_space<vmem>>, vector<8x128xf32>,
    } else {
    }
    return
  }
  func.func @transform_0(%arg0: i32) -> (i32, i32) {
    %c0_i32 = arith.constant 0 : i32
    %c0_i32_0 = arith.constant 0 : i32
    return %arg0, %c0_i32 : i32, i32
  }
  func.func @transform_1(%arg0: i32) -> (i32, i32) {
    %c0_i32 = arith.constant 0 : i32
    %c0_i32_0 = arith.constant 0 : i32
    return %arg0, %c0_i32 : i32, i32
  }
  func.func @transform_2(%arg0: i32) -> (i32, i32) {
    %c0_i32 = arith.constant 0 : i32
    %c0_i32_0 = arith.constant 0 : i32
    %c0_i32_1 = arith.constant 0 : i32
    return %c0_i32, %c0_i32_0 : i32, i32
  }
}

</mosaic_0001>

<llo_original>
// kernel: bce_loss.1
$region0: #{bce_loss.1}
  #allocation0 [shape = 'u32[]', space=smem, size = 0x4, offset = 0x4, fixed_abs, tag = 'smem constant byte address 0x4 - core index']
  #allocation1 [shape = 'u32[144,128]{1,0:T(1,128)}', space=vmem, size = 0x12000, scoped, tag = 'internal scratch']
  #allocation2 [shape = 'f32[1,4]{1,0:T(1,128)}', space=vmem, size = 0x200, scoped, tag = 'scratch operand']
  %s0 = inlined_call_operand.hbm [shape: f32[2,4], index: 0, kind: input, shape index: {}]
  %s1 = inlined_call_operand.vmem [shape: f32[2,4], index: 1, kind: input, shape index: {}]
  %s2 = inlined_call_operand.vmem [shape: f32[8,128], index: 2, kind: output, shape index: {}]
  %s3 = sld [smem:[#allocation0]]
  $region30: #{bce_loss.1} parent=0
    _
  %s5 = ssub.s32 1, %s3
  %s6 = scalar_select 0, %s5, %s3
  $region1: #{bce_loss.1} parent=0
    #allocation3 [shape = 'u8[1024]{0}', space=vmem, size = 0x400, scoped, tag = 'input window, operand 0, single buffered']
    #allocation4 [shape = 's32[1]{0}', space=sflag, size = 0x4, scoped, tag = 'scoped memory for bce_loss.1']
    %7 = vsyncpa [#allocation4], 0
    // Predicated region
    $region2: #{bce_loss.1} parent=1 // pred_check
      _
    $region3: #{bce_loss.1} parent=1 // pred_check_branch
      %9 = sbr.rel (0) target = $region5
    $region4: #{bce_loss.1} parent=1 // pred_region
      %s11 = ssub.s32 32, 32
      %12 = vsyncadd [#allocation4], %s11
      %s14 = sshll.u32 [#allocation3], 4
      %s15 = int_to_ptr.vmem [resolvable:$true] %s14
      %17 = dma.hbm_to_vmem [thread:$0]  %s0, 32, %s15, [#allocation4]
    $region5: #{bce_loss.1} parent=1 // pred_fallthru
      _
    // Predicated region
    $region6: #{bce_loss.1} parent=1 // pred_check
      _
    $region7: #{bce_loss.1} parent=1 // pred_check_branch
      %19 = sbr.rel (0) target = $region9
    $region8: #{bce_loss.1} parent=1 // pred_region
      _
    $region9: #{bce_loss.1} parent=1 // pred_fallthru
      _
    // Predicated region
    $region10: #{bce_loss.1} parent=1 // pred_check
      _
    $region11: #{bce_loss.1} parent=1 // pred_check_branch
      %21 = sbr.rel (0) target = $region13
    $region12: #{bce_loss.1} parent=1 // pred_region
      %22 = dma.done [#allocation4], 32
    $region13: #{bce_loss.1} parent=1 // pred_fallthru
      _
    %p23 = scmp.eq.s32.totalorder 0, 0
    // Predicated region
    $region14: #{bce_loss.1} parent=1 // pred_check
      %p24 = pneg %p23
    $region15: #{bce_loss.1} parent=1 // pred_check_branch
      %26 = sbr.rel (%p24) target = $region17
    $region16: #{bce_loss.1} parent=1 // pred_region
      %vm27 = vcmask 24576
      %28 = vst.msk [vmem:[#allocation2] sm:$0x1] %vm27, 0.0
    $region17: #{bce_loss.1} parent=1 // pred_fallthru
      _
    %v29 = vld [vmem:[#allocation3] sm:$0x3]
    %v30 = vld [vmem:[%s1] sm:$0x3]
    %v31 = vlog2.pop %v29
    %v32 = vmul.f32 %v31, 0.6931472
    %v33 = vmax.f32 %v32, -100.0
    %v34 = vsub.f32 1.0, %v29
    %v35 = vlog2.pop %v34
    %v36 = vmul.f32 %v35, 0.6931472
    %v37 = vmax.f32 %v36, -100.0
    %v38 = vmul.f32 %v30, %v33
    %v39 = vsub.f32 1.0, %v30
    %v40 = vmul.f32 %v39, %v37
    %v41 = vadd.f32 %v38, %v40
    %v42 = vsub.f32 0.0, %v41
    %v43 = vld [vmem:[#allocation2] sm:$0x1]
    %vm44 = vcmask 25600
    %v45 = vsel %vm44, %v42, 0.0
    %v46 = vrot.slane %v45, 4
    %v47 = vadd.f32 %v45, %v46
    %v48 = vrot.slane %v47, 2
    %v49 = vadd.f32 %v47, %v48
    %v50 = vrot.slane %v49, 1
    %v51 = vadd.f32 %v49, %v50
    %v52 = vadd.f32 %v43, %v51
    %vm53 = vcmask 24576
    %54 = vst.msk [vmem:[#allocation2] sm:$0x1] %vm53, %v52
    // Predicated region
    $region18: #{bce_loss.1} parent=1 // pred_check
      %p55 = pneg %p23
    $region19: #{bce_loss.1} parent=1 // pred_check_branch
      %57 = sbr.rel (%p55) target = $region21
    $region20: #{bce_loss.1} parent=1 // pred_region
      %v58 = vld [vmem:[#allocation2] sm:$0x1]
      %v59 = vsel %vm53, %v58, 0.0
      %60 = vadd.xlane.f32.xlu0 %v59
      %v61 = vpop.xlane.xlu0 %60
      %v62 = vrot.slane %v61, 4
      %v63 = vadd.f32 %v61, %v62
      %v64 = vrot.slane %v63, 2
      %v65 = vadd.f32 %v63, %v64
      %v66 = vrot.slane %v65, 1
      %v67 = vadd.f32 %v65, %v66
      %s68 = vtos %v67
      %s69 = smul.f32 %s68, 0.125
      %v70 = vstv %s69
      %71 = vst [vmem:[%s2] sm:$0xff] %v70
    $region21: #{bce_loss.1} parent=1 // pred_fallthru
      _
    // Predicated region
    $region22: #{bce_loss.1} parent=1 // pred_check
      _
    $region23: #{bce_loss.1} parent=1 // pred_check_branch
      %73 = sbr.rel (0) target = $region25
    $region24: #{bce_loss.1} parent=1 // pred_region
      _
    $region25: #{bce_loss.1} parent=1 // pred_fallthru
      _
    // Predicated region
    $region26: #{bce_loss.1} parent=1 // pred_check
      _
    $region27: #{bce_loss.1} parent=1 // pred_check_branch
      %75 = sbr.rel (0) target = $region29
    $region28: #{bce_loss.1} parent=1 // pred_region
      _
    $region29: #{bce_loss.1} parent=1 // pred_fallthru
      _
    %76 = vsyncpa [#allocation4], 1

</llo_original>
